<compile_context>
chip_gen: v7x
topology: tpu7x:2x2x1
jax: 0.10.0
libtpu: 0.0.40
codegen_flags: <defaults>
</compile_context>

<pallas_src>
import functools

import jax
import jax.numpy as jnp
from jax.experimental import pallas as pl
from jax.experimental.pallas import tpu as pltpu


def _cv_wrapper_kernel(p_ref, x_ref, beta_ref, out_ref, *, n_total, tile_n, chunk):
    i = pl.program_id(0)
    nchunks = tile_n // chunk
    beta = beta_ref[...]                                   # (D, 1), hoisted

    def block_partial(masked):
        def body(c, acc):
            off = pl.multiple_of(c * chunk, chunk)
            xc = x_ref[pl.ds(off, chunk), :]               # (chunk, D), native layout
            xt = jnp.transpose(xc)                         # (D, chunk) — XLU relayout
            logits = jnp.sum(xt * beta, axis=0, keepdims=True)   # (1, chunk) lane-dense
            probs = jax.nn.sigmoid(logits)                 # EUP, lane-dense
            p = p_ref[:, pl.ds(off, chunk)]                # (1, chunk)
            err = p + (1.0 - 2.0 * p) * probs              # == p*(1-probs) + (1-p)*probs
            if masked:
                # Only instantiated for the (partial) last grid block.
                col = jax.lax.broadcasted_iota(jnp.int32, err.shape, 1)
                err = jnp.where(i * tile_n + off + col < n_total, err, 0.0)
            return acc + err

        acc = jax.lax.fori_loop(0, nchunks, body,
                                jnp.zeros((1, chunk), jnp.float32),
                                unroll=nchunks <= 8)

        # Fold the (1, chunk) lane-dense partial into a (1, 128) row (VPU adds
        # only) and place it in sublane 0 of the (1, 8, 128) output tile.
        if chunk % 128 == 0:
            row = acc[:, 0:128]
            for k in range(1, chunk // 128):
                row = row + acc[:, k * 128:(k + 1) * 128]
        else:  # tiny-N fallback (chunk == tile_n == N < 128)
            lane = jax.lax.broadcasted_iota(jnp.int32, (1, 128), 1)
            row = jnp.where(lane == 0, jnp.sum(acc), 0.0)
        sub = jax.lax.broadcasted_iota(jnp.int32, (1, 8, 128), 1)
        return jnp.where(sub == 0, row.reshape(1, 1, 128), 0.0)

    if n_total % tile_n != 0:
        last = pl.num_programs(0) - 1

        @pl.when(i != last)
        def _full():
            out_ref[...] = block_partial(False)

        @pl.when(i == last)
        def _ragged():
            out_ref[...] = block_partial(True)
    else:
        out_ref[...] = block_partial(False)


def _select_tiling(N, D, tile_n_req, vmem_cap):
    """Pick (tile_n, chunk): lane-aligned tile sized from D and the VMEM budget."""
    chunk = 256 if D <= 128 else 128                 # per-chunk vreg-footprint guard
    if N < chunk:
        return N, N                                  # single full-array block / chunk
    cap_by_n = (N // chunk) * chunk
    if tile_n_req is None:
        budget = min(vmem_cap // 4, 32 << 20)        # double-buffered input budget
        want = max((1 << 20) // (4 * D), chunk)      # ~1 MiB of X per grid block
        cap_vmem = max(chunk, budget // (2 * 4 * (D + 1)))
        tile_n = min(want, cap_vmem, cap_by_n)
    else:
        tile_n = min(max(int(tile_n_req), chunk), cap_by_n)
    tile_n = max(chunk, (tile_n // chunk) * chunk)
    return tile_n, chunk


def cv_wrapper_regressor(P, X, beta, *, tile_n=None):
    """P: (N,1) f32, X: (N,D) f32, beta: (D,1) f32 -> (1,1) f32 worst-case variance."""
    N, D = X.shape

    try:  # per-generation VMEM capacity (v5e/v6e: 128 MiB, v7x: 64 MiB)
        vmem_cap = int(getattr(pltpu.get_tpu_info(), "vmem_capacity_bytes", 0)) or (64 << 20)
    except Exception:
        vmem_cap = 64 << 20                          # conservative fallback

    tile_n, chunk = _select_tiling(N, D, tile_n, vmem_cap)
    num_blocks = pl.cdiv(N, tile_n)

    # Layout plumbing (free bitcast-reshapes only; no materialized transpose of X).
    p_row = P.reshape(1, N)                          # (1, N)
    beta_col = beta.reshape(D, 1)                    # (D, 1)

    in_bytes = 2 * 4 * tile_n * (D + 1)              # double-buffered P + X blocks
    vmem_limit = int(min(vmem_cap // 2, max(32 << 20, 2 * in_bytes)))

    kernel = functools.partial(_cv_wrapper_kernel,
                               n_total=N, tile_n=tile_n, chunk=chunk)

    partials = pl.pallas_call(
        kernel,
        out_shape=jax.ShapeDtypeStruct((num_blocks, 8, 128), jnp.float32),
        grid_spec=pltpu.PrefetchScalarGridSpec(
            num_scalar_prefetch=0,
            grid=(num_blocks,),
            in_specs=[
                pl.BlockSpec((1, tile_n), lambda i: (0, i)),     # P  (lanes = samples)
                pl.BlockSpec((tile_n, D), lambda i: (i, 0)),     # X  native layout
                pl.BlockSpec((D, 1), lambda i: (0, 0)),          # beta (resident)
            ],
            out_specs=pl.BlockSpec((1, 8, 128), lambda i: (i, 0, 0)),
        ),
        compiler_params=pltpu.CompilerParams(
            dimension_semantics=("parallel",),       # per-block outputs -> both TCs on v7x
            vmem_limit_bytes=vmem_limit,
        ),
    )(p_row, X, beta_col)

    # Finish the reduction in plain JAX (tiny): cv_risk and worst-case variance.
    cv_risk = jnp.sum(partials) / N
    return ((1.0 - cv_risk) * cv_risk).reshape(1, 1)


def cv_wrapper_regressor_ref(P, X, beta):
    logits = X @ beta
    probs = jax.nn.sigmoid(logits)
    err = P * (1.0 - probs) + (1.0 - P) * probs
    cv_risk = jnp.mean(err)
    return ((1.0 - cv_risk) * cv_risk).reshape(1, 1)


if __name__ == "__main__":
    key = jax.random.PRNGKey(0)
    kP, kX, kB = jax.random.split(key, 3)

    N, D = 1024, 32
    P = jax.random.uniform(kP, (N, 1), dtype=jnp.float32)           # soft labels in [0, 1]
    X = jax.random.normal(kX, (N, D), dtype=jnp.float32)            # features
    beta = 0.1 * jax.random.normal(kB, (D, 1), dtype=jnp.float32)   # coefficients

    ref = cv_wrapper_regressor_ref(P, X, beta)

    # auto-sized tile (single block at this small N, inner chunk loop of 4)
    out_auto = jax.block_until_ready(cv_wrapper_regressor(P, X, beta))
    assert jnp.allclose(out_auto, ref, atol=1e-5, rtol=1e-5), (out_auto, ref)

    # explicit small tile -> multi-block "parallel" streaming path (grid of 4)
    out_multi = jax.block_until_ready(cv_wrapper_regressor(P, X, beta, tile_n=256))
    assert jnp.allclose(out_multi, ref, atol=1e-5, rtol=1e-5), (out_multi, ref)

    # ragged N (exercises the last-block-only padded-lane mask path)
    N2 = 1000
    P2, X2 = P[:N2], X[:N2]
    ref2 = cv_wrapper_regressor_ref(P2, X2, beta)
    out2 = jax.block_until_ready(cv_wrapper_regressor(P2, X2, beta, tile_n=256))
    assert jnp.allclose(out2, ref2, atol=1e-5, rtol=1e-5), (out2, ref2)

    print("KERNEL_OK")
</pallas_src>

<mosaic_0001>
module attributes {stable_mosaic.version = 11 : i64} {
  func.func @_cv_wrapper_kernel(%arg0: i32, %arg1: memref<1x1024xf32, #tpu.memory_space<vmem>>, %arg2: memref<1024x32xf32, #tpu.memory_space<vmem>>, %arg3: memref<32x1xf32, #tpu.memory_space<vmem>>, %arg4: memref<1x8x128xf32, #tpu.memory_space<vmem>>) attributes {dimension_semantics = [#tpu.dimension_semantics<parallel>], iteration_bounds = array<i64: 1>, scalar_prefetch = 0 : i64, scratch_operands = 0 : i64, tpu.core_type = #tpu.core_type<tc>, window_params = [{transform_indices = @transform_0, window_bounds = array<i64: 1, 1024>}, {transform_indices = @transform_1, window_bounds = array<i64: 1024, 32>}, {pipeline_mode = #tpu.pipeline_mode<synchronous>, transform_indices = @transform_2, window_bounds = array<i64: 32, 1>}, {transform_indices = @transform_3, window_bounds = array<i64: 1, 8, 128>}]} {
    %c0 = arith.constant 0 : index
    %c0_0 = arith.constant 0 : index
    %0 = vector.load %arg3[%c0, %c0_0] : memref<32x1xf32, #tpu.memory_space<vmem>>, vector<32x1xf32>
    %cst = arith.constant 0.000000e+00 : f32
    %1 = vector.broadcast %cst : f32 to vector<1x256xf32>
    %c0_i32 = arith.constant 0 : i32
    %c256_i32 = arith.constant 256 : i32
    %2 = arith.muli %c0_i32, %c256_i32 : i32
    %3 = tpu.assume_multiple %2, 256 : i32
    %4 = arith.index_cast %3 : i32 to index
    %c0_1 = arith.constant 0 : index
    %5 = vector.load %arg2[%4, %c0_1] : memref<1024x32xf32, #tpu.memory_space<vmem>>, vector<256x32xf32>
    %6 = tpu.transpose %5, [1, 0] : vector<256x32xf32> -> vector<32x256xf32>
    %7 = vector.broadcast %0 : vector<32x1xf32> to vector<32x256xf32>
    %8 = arith.mulf %6, %7 : vector<32x256xf32>
    %cst_2 = arith.constant dense<0.000000e+00> : vector<256xf32>
    %9 = vector.multi_reduction <add>, %8, %cst_2 [0] : vector<32x256xf32> to vector<256xf32>
    %10 = vector.shape_cast %9 : vector<256xf32> to vector<1x256xf32>
    %11 = arith.negf %10 : vector<1x256xf32>
    %12 = math.exp %11 : vector<1x256xf32>
    %cst_3 = arith.constant 1.000000e+00 : f32
    %13 = vector.broadcast %cst_3 : f32 to vector<1x256xf32>
    %14 = arith.addf %13, %12 : vector<1x256xf32>
    %15 = arith.divf %13, %14 : vector<1x256xf32>
    %c0_4 = arith.constant 0 : index
    %16 = arith.index_cast %3 : i32 to index
    %17 = vector.load %arg1[%c0_4, %16] : memref<1x1024xf32, #tpu.memory_space<vmem>>, vector<1x256xf32>
    %cst_5 = arith.constant 2.000000e+00 : f32
    %18 = vector.broadcast %cst_5 : f32 to vector<1x256xf32>
    %19 = arith.mulf %18, %17 : vector<1x256xf32>
    %cst_6 = arith.constant 1.000000e+00 : f32
    %20 = vector.broadcast %cst_6 : f32 to vector<1x256xf32>
    %21 = arith.subf %20, %19 : vector<1x256xf32>
    %22 = arith.mulf %21, %15 : vector<1x256xf32>
    %23 = arith.addf %17, %22 : vector<1x256xf32>
    %24 = arith.addf %1, %23 : vector<1x256xf32>
    %c1_i32 = arith.constant 1 : i32
    %c256_i32_7 = arith.constant 256 : i32
    %25 = arith.muli %c1_i32, %c256_i32_7 : i32
    %26 = tpu.assume_multiple %25, 256 : i32
    %27 = arith.index_cast %26 : i32 to index
    %c0_8 = arith.constant 0 : index
    %28 = vector.load %arg2[%27, %c0_8] : memref<1024x32xf32, #tpu.memory_space<vmem>>, vector<256x32xf32>
    %29 = tpu.transpose %28, [1, 0] : vector<256x32xf32> -> vector<32x256xf32>
    %30 = vector.broadcast %0 : vector<32x1xf32> to vector<32x256xf32>
    %31 = arith.mulf %29, %30 : vector<32x256xf32>
    %cst_9 = arith.constant dense<0.000000e+00> : vector<256xf32>
    %32 = vector.multi_reduction <add>, %31, %cst_9 [0] : vector<32x256xf32> to vector<256xf32>
    %33 = vector.shape_cast %32 : vector<256xf32> to vector<1x256xf32>
    %34 = arith.negf %33 : vector<1x256xf32>
    %35 = math.exp %34 : vector<1x256xf32>
    %cst_10 = arith.constant 1.000000e+00 : f32
    %36 = vector.broadcast %cst_10 : f32 to vector<1x256xf32>
    %37 = arith.addf %36, %35 : vector<1x256xf32>
    %38 = arith.divf %36, %37 : vector<1x256xf32>
    %c0_11 = arith.constant 0 : index
    %39 = arith.index_cast %26 : i32 to index
    %40 = vector.load %arg1[%c0_11, %39] : memref<1x1024xf32, #tpu.memory_space<vmem>>, vector<1x256xf32>
    %cst_12 = arith.constant 2.000000e+00 : f32
    %41 = vector.broadcast %cst_12 : f32 to vector<1x256xf32>
    %42 = arith.mulf %41, %40 : vector<1x256xf32>
    %cst_13 = arith.constant 1.000000e+00 : f32
    %43 = vector.broadcast %cst_13 : f32 to vector<1x256xf32>
    %44 = arith.subf %43, %42 : vector<1x256xf32>
    %45 = arith.mulf %44, %38 : vector<1x256xf32>
    %46 = arith.addf %40, %45 : vector<1x256xf32>
    %47 = arith.addf %24, %46 : vector<1x256xf32>
    %c2_i32 = arith.constant 2 : i32
    %c256_i32_14 = arith.constant 256 : i32
    %48 = arith.muli %c2_i32, %c256_i32_14 : i32
    %49 = tpu.assume_multiple %48, 256 : i32
    %50 = arith.index_cast %49 : i32 to index
    %c0_15 = arith.constant 0 : index
    %51 = vector.load %arg2[%50, %c0_15] : memref<1024x32xf32, #tpu.memory_space<vmem>>, vector<256x32xf32>
    %52 = tpu.transpose %51, [1, 0] : vector<256x32xf32> -> vector<32x256xf32>
    %53 = vector.broadcast %0 : vector<32x1xf32> to vector<32x256xf32>
    %54 = arith.mulf %52, %53 : vector<32x256xf32>
    %cst_16 = arith.constant dense<0.000000e+00> : vector<256xf32>
    %55 = vector.multi_reduction <add>, %54, %cst_16 [0] : vector<32x256xf32> to vector<256xf32>
    %56 = vector.shape_cast %55 : vector<256xf32> to vector<1x256xf32>
    %57 = arith.negf %56 : vector<1x256xf32>
    %58 = math.exp %57 : vector<1x256xf32>
    %cst_17 = arith.constant 1.000000e+00 : f32
    %59 = vector.broadcast %cst_17 : f32 to vector<1x256xf32>
    %60 = arith.addf %59, %58 : vector<1x256xf32>
    %61 = arith.divf %59, %60 : vector<1x256xf32>
    %c0_18 = arith.constant 0 : index
    %62 = arith.index_cast %49 : i32 to index
    %63 = vector.load %arg1[%c0_18, %62] : memref<1x1024xf32, #tpu.memory_space<vmem>>, vector<1x256xf32>
    %cst_19 = arith.constant 2.000000e+00 : f32
    %64 = vector.broadcast %cst_19 : f32 to vector<1x256xf32>
    %65 = arith.mulf %64, %63 : vector<1x256xf32>
    %cst_20 = arith.constant 1.000000e+00 : f32
    %66 = vector.broadcast %cst_20 : f32 to vector<1x256xf32>
    %67 = arith.subf %66, %65 : vector<1x256xf32>
    %68 = arith.mulf %67, %61 : vector<1x256xf32>
    %69 = arith.addf %63, %68 : vector<1x256xf32>
    %70 = arith.addf %47, %69 : vector<1x256xf32>
    %c3_i32 = arith.constant 3 : i32
    %c256_i32_21 = arith.constant 256 : i32
    %71 = arith.muli %c3_i32, %c256_i32_21 : i32
    %72 = tpu.assume_multiple %71, 256 : i32
    %73 = arith.index_cast %72 : i32 to index
    %c0_22 = arith.constant 0 : index
    %74 = vector.load %arg2[%73, %c0_22] : memref<1024x32xf32, #tpu.memory_space<vmem>>, vector<256x32xf32>
    %75 = tpu.transpose %74, [1, 0] : vector<256x32xf32> -> vector<32x256xf32>
    %76 = vector.broadcast %0 : vector<32x1xf32> to vector<32x256xf32>
    %77 = arith.mulf %75, %76 : vector<32x256xf32>
    %cst_23 = arith.constant dense<0.000000e+00> : vector<256xf32>
    %78 = vector.multi_reduction <add>, %77, %cst_23 [0] : vector<32x256xf32> to vector<256xf32>
    %79 = vector.shape_cast %78 : vector<256xf32> to vector<1x256xf32>
    %80 = arith.negf %79 : vector<1x256xf32>
    %81 = math.exp %80 : vector<1x256xf32>
    %cst_24 = arith.constant 1.000000e+00 : f32
    %82 = vector.broadcast %cst_24 : f32 to vector<1x256xf32>
    %83 = arith.addf %82, %81 : vector<1x256xf32>
    %84 = arith.divf %82, %83 : vector<1x256xf32>
    %c0_25 = arith.constant 0 : index
    %85 = arith.index_cast %72 : i32 to index
    %86 = vector.load %arg1[%c0_25, %85] : memref<1x1024xf32, #tpu.memory_space<vmem>>, vector<1x256xf32>
    %cst_26 = arith.constant 2.000000e+00 : f32
    %87 = vector.broadcast %cst_26 : f32 to vector<1x256xf32>
    %88 = arith.mulf %87, %86 : vector<1x256xf32>
    %cst_27 = arith.constant 1.000000e+00 : f32
    %89 = vector.broadcast %cst_27 : f32 to vector<1x256xf32>
    %90 = arith.subf %89, %88 : vector<1x256xf32>
    %91 = arith.mulf %90, %84 : vector<1x256xf32>
    %92 = arith.addf %86, %91 : vector<1x256xf32>
    %93 = arith.addf %70, %92 : vector<1x256xf32>
    %c4_i32 = arith.constant 4 : i32
    %94 = vector.extract_strided_slice %93 {offsets = [0, 0], sizes = [1, 128], strides = [1, 1]} : vector<1x256xf32> to vector<1x128xf32>
    %95 = vector.extract_strided_slice %93 {offsets = [0, 128], sizes = [1, 128], strides = [1, 1]} : vector<1x256xf32> to vector<1x128xf32>
    %96 = arith.addf %94, %95 : vector<1x128xf32>
    %97 = tpu.iota {dimensions = array<i32: 1>} : vector<1x8x128xi32>
    %c0_i32_28 = arith.constant 0 : i32
    %98 = vector.broadcast %c0_i32_28 : i32 to vector<1x8x128xi32>
    %99 = arith.cmpi eq, %97, %98 : vector<1x8x128xi32>
    %100 = vector.shape_cast %96 : vector<1x128xf32> to vector<1x1x128xf32>
    %cst_29 = arith.constant 0.000000e+00 : f32
    %101 = vector.shape_cast %100 : vector<1x1x128xf32> to vector<1x1x128xf32>
    %102 = vector.broadcast %101 : vector<1x1x128xf32> to vector<1x8x128xf32>
    %103 = vector.broadcast %cst_29 : f32 to vector<1x8x128xf32>
    %104 = arith.select %99, %102, %103 : vector<1x8x128xi1>, vector<1x8x128xf32>
    %c0_30 = arith.constant 0 : index
    %c0_31 = arith.constant 0 : index
    %c0_32 = arith.constant 0 : index
    %105 = vector.load %arg4[%c0_30, %c0_31, %c0_32] : memref<1x8x128xf32, #tpu.memory_space<vmem>>, vector<1x8x128xf32>
    tpu.vector_store %arg4[%c0_30, %c0_31, %c0_32], %104 {strides = array<i32>} : memref<1x8x128xf32, #tpu.memory_space<vmem>>, vector<1x8x128xf32>,
    return
  }
  func.func @transform_0(%arg0: i32) -> (i32, i32) {
    %c0_i32 = arith.constant 0 : i32
    %c0_i32_0 = arith.constant 0 : i32
    return %c0_i32, %arg0 : i32, i32
  }
  func.func @transform_1(%arg0: i32) -> (i32, i32) {
    %c0_i32 = arith.constant 0 : i32
    %c0_i32_0 = arith.constant 0 : i32
    return %arg0, %c0_i32 : i32, i32
  }
  func.func @transform_2(%arg0: i32) -> (i32, i32) {
    %c0_i32 = arith.constant 0 : i32
    %c0_i32_0 = arith.constant 0 : i32
    %c0_i32_1 = arith.constant 0 : i32
    return %c0_i32, %c0_i32_0 : i32, i32
  }
  func.func @transform_3(%arg0: i32) -> (i32, i32, i32) {
    %c0_i32 = arith.constant 0 : i32
    %c0_i32_0 = arith.constant 0 : i32
    %c0_i32_1 = arith.constant 0 : i32
    return %arg0, %c0_i32, %c0_i32_0 : i32, i32, i32
  }
}

</mosaic_0001>

<llo_original>
// kernel: tpu_custom_call.1
$region0: #{tpu_custom_call.1}
  #allocation0 [shape = 'u32[]', space=smem, size = 0x4, offset = 0x4, fixed_abs, tag = 'smem constant byte address 0x4 - core index']
  #allocation1 [shape = 'u32[144,128]{1,0:T(1,128)}', space=vmem, size = 0x12000, scoped, tag = 'internal scratch']
  %s0 = inlined_call_operand.vmem [shape: f32[1,1024], index: 0, kind: input, shape index: {}]
  %s1 = inlined_call_operand.vmem [shape: f32[1024,32], index: 1, kind: input, shape index: {}]
  %s2 = inlined_call_operand.vmem [shape: f32[32,1], index: 2, kind: input, shape index: {}]
  %s3 = inlined_call_operand.hbm [shape: f32[1,8,128], index: 3, kind: output, shape index: {}]
  %s4 = sld [smem:[#allocation0]]
  $region22: #{tpu_custom_call.1} parent=0
    _
  %s6 = ssub.s32 1, %s4
  %s7 = scalar_select 0, %s6, %s4
  $region1: #{tpu_custom_call.1} parent=0
    #allocation2 [shape = 'u8[4096]{0}', space=vmem, size = 0x1000, scoped, tag = 'output window, operand 0, single buffered']
    #allocation3 [shape = 's32[1]{0}', space=sflag, size = 0x4, scoped, tag = 'scoped memory for tpu_custom_call.1']
    %8 = vsyncpa [#allocation3], 0
    // Predicated region
    $region2: #{tpu_custom_call.1} parent=1 // pred_check
      _
    $region3: #{tpu_custom_call.1} parent=1 // pred_check_branch
      %10 = sbr.rel (0) target = $region5
    $region4: #{tpu_custom_call.1} parent=1 // pred_region
      _
    $region5: #{tpu_custom_call.1} parent=1 // pred_fallthru
      _
    // Predicated region
    $region6: #{tpu_custom_call.1} parent=1 // pred_check
      _
    $region7: #{tpu_custom_call.1} parent=1 // pred_check_branch
      %12 = sbr.rel (0) target = $region9
    $region8: #{tpu_custom_call.1} parent=1 // pred_region
      _
    $region9: #{tpu_custom_call.1} parent=1 // pred_fallthru
      _
    // Predicated region
    $region10: #{tpu_custom_call.1} parent=1 // pred_check
      _
    $region11: #{tpu_custom_call.1} parent=1 // pred_check_branch
      %14 = sbr.rel (0) target = $region13
    $region12: #{tpu_custom_call.1} parent=1 // pred_region
      _
    $region13: #{tpu_custom_call.1} parent=1 // pred_fallthru
      _
    %v15 = vld [vmem:[%s2] sm:$0xff]
    %v16 = vld [vmem:[%s2 + $0x8] sm:$0xff]
    %v17 = vld [vmem:[%s2 + $0x10] sm:$0xff]
    %v18 = vld [vmem:[%s2 + $0x18] sm:$0xff]
    %v19 = vld [vmem:[%s1] sm:$0xff]
    %v20 = vld [vmem:[%s1 + $0x8] sm:$0xff]
    %v21 = vld [vmem:[%s1 + $0x10] sm:$0xff]
    %v22 = vld [vmem:[%s1 + $0x18] sm:$0xff]
    %v23 = vld [vmem:[%s1 + $0x20] sm:$0xff]
    %v24 = vld [vmem:[%s1 + $0x28] sm:$0xff]
    %v25 = vld [vmem:[%s1 + $0x30] sm:$0xff]
    %v26 = vld [vmem:[%s1 + $0x38] sm:$0xff]
    %v27 = vld [vmem:[%s1 + $0x40] sm:$0xff]
    %v28 = vld [vmem:[%s1 + $0x48] sm:$0xff]
    %v29 = vld [vmem:[%s1 + $0x50] sm:$0xff]
    %v30 = vld [vmem:[%s1 + $0x58] sm:$0xff]
    %v31 = vld [vmem:[%s1 + $0x60] sm:$0xff]
    %v32 = vld [vmem:[%s1 + $0x68] sm:$0xff]
    %v33 = vld [vmem:[%s1 + $0x70] sm:$0xff]
    %v34 = vld [vmem:[%s1 + $0x78] sm:$0xff]
    %v35 = vld [vmem:[%s1 + $0x80] sm:$0xff]
    %v36 = vld [vmem:[%s1 + $0x88] sm:$0xff]
    %v37 = vld [vmem:[%s1 + $0x90] sm:$0xff]
    %v38 = vld [vmem:[%s1 + $0x98] sm:$0xff]
    %v39 = vld [vmem:[%s1 + $0xa0] sm:$0xff]
    %v40 = vld [vmem:[%s1 + $0xa8] sm:$0xff]
    %v41 = vld [vmem:[%s1 + $0xb0] sm:$0xff]
    %v42 = vld [vmem:[%s1 + $0xb8] sm:$0xff]
    %v43 = vld [vmem:[%s1 + $0xc0] sm:$0xff]
    %v44 = vld [vmem:[%s1 + $0xc8] sm:$0xff]
    %v45 = vld [vmem:[%s1 + $0xd0] sm:$0xff]
    %v46 = vld [vmem:[%s1 + $0xd8] sm:$0xff]
    %v47 = vld [vmem:[%s1 + $0xe0] sm:$0xff]
    %v48 = vld [vmem:[%s1 + $0xe8] sm:$0xff]
    %v49 = vld [vmem:[%s1 + $0xf0] sm:$0xff]
    %v50 = vld [vmem:[%s1 + $0xf8] sm:$0xff]
    %51 = vxpose.xlu0.b32.start [1/16] %v19, 128
    %52 = vxpose.xlu0.b32.cont [2/16] %v20, 128
    %53 = vxpose.xlu0.b32.cont [3/16] %v21, 128
    %54 = vxpose.xlu0.b32.cont [4/16] %v22, 128
    %55 = vxpose.xlu0.b32.cont [5/16] %v23, 128
    %56 = vxpose.xlu0.b32.cont [6/16] %v24, 128
    %57 = vxpose.xlu0.b32.cont [7/16] %v25, 128
    %58 = vxpose.xlu0.b32.cont [8/16] %v26, 128
    %59 = vxpose.xlu0.b32.cont [9/16] %v27, 128
    %60 = vxpose.xlu0.b32.cont [10/16] %v28, 128
    %61 = vxpose.xlu0.b32.cont [11/16] %v29, 128
    %62 = vxpose.xlu0.b32.cont [12/16] %v30, 128
    %63 = vxpose.xlu0.b32.cont [13/16] %v31, 128
    %64 = vxpose.xlu0.b32.cont [14/16] %v32, 128
    %65 = vxpose.xlu0.b32.cont [15/16] %v33, 128
    %66 = vxpose.xlu0.b32.end [16/16] %v34, 128
    %v67 = vpop.trf.xlu0
    %v68 = vpop.trf.xlu0
    %v69 = vpop.trf.xlu0
    %v70 = vpop.trf.xlu0
    %v71 = vpop.trf.xlu0
    %v72 = vpop.trf.xlu0
    %v73 = vpop.trf.xlu0
    %v74 = vpop.trf.xlu0
    %v75 = vpop.trf.xlu0
    %v76 = vpop.trf.xlu0
    %v77 = vpop.trf.xlu0
    %v78 = vpop.trf.xlu0
    %v79 = vpop.trf.xlu0
    %v80 = vpop.trf.xlu0
    %v81 = vpop.trf.xlu0
    %v82 = vpop.trf.xlu0
    %83 = vxpose.xlu0.b32.start [1/16] %v35, 128
    %84 = vxpose.xlu0.b32.cont [2/16] %v36, 128
    %85 = vxpose.xlu0.b32.cont [3/16] %v37, 128
    %86 = vxpose.xlu0.b32.cont [4/16] %v38, 128
    %87 = vxpose.xlu0.b32.cont [5/16] %v39, 128
    %88 = vxpose.xlu0.b32.cont [6/16] %v40, 128
    %89 = vxpose.xlu0.b32.cont [7/16] %v41, 128
    %90 = vxpose.xlu0.b32.cont [8/16] %v42, 128
    %91 = vxpose.xlu0.b32.cont [9/16] %v43, 128
    %92 = vxpose.xlu0.b32.cont [10/16] %v44, 128
    %93 = vxpose.xlu0.b32.cont [11/16] %v45, 128
    %94 = vxpose.xlu0.b32.cont [12/16] %v46, 128
    %95 = vxpose.xlu0.b32.cont [13/16] %v47, 128
    %96 = vxpose.xlu0.b32.cont [14/16] %v48, 128
    %97 = vxpose.xlu0.b32.cont [15/16] %v49, 128
    %98 = vxpose.xlu0.b32.end [16/16] %v50, 128
    %v99 = vpop.trf.xlu0
    %v100 = vpop.trf.xlu0
    %v101 = vpop.trf.xlu0
    %v102 = vpop.trf.xlu0
    %v103 = vpop.trf.xlu0
    %v104 = vpop.trf.xlu0
    %v105 = vpop.trf.xlu0
    %v106 = vpop.trf.xlu0
    %v107 = vpop.trf.xlu0
    %v108 = vpop.trf.xlu0
    %v109 = vpop.trf.xlu0
    %v110 = vpop.trf.xlu0
    %v111 = vpop.trf.xlu0
    %v112 = vpop.trf.xlu0
    %v113 = vpop.trf.xlu0
    %v114 = vpop.trf.xlu0
    %116 = vset.pattern.permute.xlu0 0
    %117 = vperm.xlu0 %116, %v15
    %v118 = vpop.permute.xlu0 %117
    %121 = vset.pattern.permute.xlu0 0
    %122 = vperm.xlu0 %121, %v16
    %v123 = vpop.permute.xlu0 %122
    %126 = vset.pattern.permute.xlu0 0
    %127 = vperm.xlu0 %126, %v17
    %v128 = vpop.permute.xlu0 %127
    %131 = vset.pattern.permute.xlu0 0
    %132 = vperm.xlu0 %131, %v18
    %v133 = vpop.permute.xlu0 %132
    %v135 = vmul.f32 %v67, %v118
    %v136 = vmul.f32 %v99, %v118
    %v137 = vmul.f32 %v68, %v123
    %v138 = vmul.f32 %v100, %v123
    %v139 = vmul.f32 %v69, %v128
    %v140 = vmul.f32 %v101, %v128
    %v141 = vmul.f32 %v70, %v133
    %v142 = vmul.f32 %v102, %v133
    %v143 = vadd.f32 %v135, %v137
    %v144 = vadd.f32 %v143, %v139
    %v145 = vadd.f32 %v144, %v141
    %v146 = vrot.slane %v145, 4
    %v147 = vadd.f32 %v145, %v146
    %v148 = vrot.slane %v147, 2
    %v149 = vadd.f32 %v147, %v148
    %v150 = vrot.slane %v149, 1
    %v151 = vadd.f32 %v149, %v150
    %v152 = vadd.f32 %v136, %v138
    %v153 = vadd.f32 %v152, %v140
    %v154 = vadd.f32 %v153, %v142
    %v155 = vrot.slane %v154, 4
    %v156 = vadd.f32 %v154, %v155
    %v157 = vrot.slane %v156, 2
    %v158 = vadd.f32 %v156, %v157
    %v159 = vrot.slane %v158, 1
    %v160 = vadd.f32 %v158, %v159
    %v161 = vxor.u32 %v151, 2147483648
    %v162 = vxor.u32 %v160, 2147483648
    %v163 = vmul.f32 %v161, 1.442695
    %v164 = vpow.pop %v163
    %v165 = vmul.f32 %v162, 1.442695
    %v166 = vpow.pop %v165
    %v167 = vadd.f32 %v164, 1.0
    %v168 = vadd.f32 %v166, 1.0
    %v169 = vrcp.pop %v167
    %v170 = vmul.f32 1.0, %v169
    %v171 = vrcp.pop %v168
    %v172 = vmul.f32 1.0, %v171
    %v173 = vld [vmem:[%s0] sm:$0x3]
    %v174 = vmul.f32 %v173, 2.0
    %v175 = vsub.f32 1.0, %v174
    %v178 = vcombine.low %v170, %v172
    %v180 = vunpack.c.l.s4 1966171168
    %v181 = vunpack.c.0.s8 %v180
    %v182 = vlaneseq
    %v183 = vshrl.u32 %v182, 7
    %v184 = vsub.s32 %v181, %v183
    %v185 = vrot.slane %v178, %v184
    %v187 = vunpack.c.l.s4 1966171168
    %v188 = vunpack.c.0.s8 %v187
    %v189 = vlaneseq
    %v190 = vshrl.u32 %v189, 7
    %v191 = vsub.s32 %v188, %v190
    %v192 = vrot.slane %v185, %v191
    %v194 = vmul.f32 %v175, %v192
    %v195 = vadd.f32 %v173, %v194
    %v196 = vadd.f32 %v195, 0.0
    %s197 = scalar_lea.vmem %s1, 256
    %v198 = vld [vmem:[%s197] sm:$0xff]
    %v199 = vld [vmem:[%s197 + $0x8] sm:$0xff]
    %v200 = vld [vmem:[%s197 + $0x10] sm:$0xff]
    %v201 = vld [vmem:[%s197 + $0x18] sm:$0xff]
    %v202 = vld [vmem:[%s197 + $0x20] sm:$0xff]
    %v203 = vld [vmem:[%s197 + $0x28] sm:$0xff]
    %v204 = vld [vmem:[%s197 + $0x30] sm:$0xff]
    %v205 = vld [vmem:[%s197 + $0x38] sm:$0xff]
    %v206 = vld [vmem:[%s197 + $0x40] sm:$0xff]
    %v207 = vld [vmem:[%s197 + $0x48] sm:$0xff]
    %v208 = vld [vmem:[%s197 + $0x50] sm:$0xff]
    %v209 = vld [vmem:[%s197 + $0x58] sm:$0xff]
    %v210 = vld [vmem:[%s197 + $0x60] sm:$0xff]
    %v211 = vld [vmem:[%s197 + $0x68] sm:$0xff]
    %v212 = vld [vmem:[%s197 + $0x70] sm:$0xff]
    %v213 = vld [vmem:[%s197 + $0x78] sm:$0xff]
    %v214 = vld [vmem:[%s197 + $0x80] sm:$0xff]
    %v215 = vld [vmem:[%s197 + $0x88] sm:$0xff]
    %v216 = vld [vmem:[%s197 + $0x90] sm:$0xff]
    %v217 = vld [vmem:[%s197 + $0x98] sm:$0xff]
    %v218 = vld [vmem:[%s197 + $0xa0] sm:$0xff]
    %v219 = vld [vmem:[%s197 + $0xa8] sm:$0xff]
    %v220 = vld [vmem:[%s197 + $0xb0] sm:$0xff]
    %v221 = vld [vmem:[%s197 + $0xb8] sm:$0xff]
    %v222 = vld [vmem:[%s197 + $0xc0] sm:$0xff]
    %v223 = vld [vmem:[%s197 + $0xc8] sm:$0xff]
    %v224 = vld [vmem:[%s197 + $0xd0] sm:$0xff]
    %v225 = vld [vmem:[%s197 + $0xd8] sm:$0xff]
    %v226 = vld [vmem:[%s197 + $0xe0] sm:$0xff]
    %v227 = vld [vmem:[%s197 + $0xe8] sm:$0xff]
    %v228 = vld [vmem:[%s197 + $0xf0] sm:$0xff]
    %v229 = vld [vmem:[%s197 + $0xf8] sm:$0xff]
    %230 = vxpose.xlu0.b32.start [1/16] %v198, 128
    %231 = vxpose.xlu0.b32.cont [2/16] %v199, 128
    %232 = vxpose.xlu0.b32.cont [3/16] %v200, 128
    %233 = vxpose.xlu0.b32.cont [4/16] %v201, 128
    %234 = vxpose.xlu0.b32.cont [5/16] %v202, 128
    %235 = vxpose.xlu0.b32.cont [6/16] %v203, 128
    %236 = vxpose.xlu0.b32.cont [7/16] %v204, 128
    %237 = vxpose.xlu0.b32.cont [8/16] %v205, 128
    %238 = vxpose.xlu0.b32.cont [9/16] %v206, 128
    %239 = vxpose.xlu0.b32.cont [10/16] %v207, 128
    %240 = vxpose.xlu0.b32.cont [11/16] %v208, 128
    %241 = vxpose.xlu0.b32.cont [12/16] %v209, 128
    %242 = vxpose.xlu0.b32.cont [13/16] %v210, 128
    %243 = vxpose.xlu0.b32.cont [14/16] %v211, 128
    %244 = vxpose.xlu0.b32.cont [15/16] %v212, 128
    %245 = vxpose.xlu0.b32.end [16/16] %v213, 128
    %v246 = vpop.trf.xlu0
    %v247 = vpop.trf.xlu0
    %v248 = vpop.trf.xlu0
    %v249 = vpop.trf.xlu0
    %v250 = vpop.trf.xlu0
    %v251 = vpop.trf.xlu0
    %v252 = vpop.trf.xlu0
    %v253 = vpop.trf.xlu0
    %v254 = vpop.trf.xlu0
    %v255 = vpop.trf.xlu0
    %v256 = vpop.trf.xlu0
    %v257 = vpop.trf.xlu0
    %v258 = vpop.trf.xlu0
    %v259 = vpop.trf.xlu0
    %v260 = vpop.trf.xlu0
    %v261 = vpop.trf.xlu0
    %262 = vxpose.xlu0.b32.start [1/16] %v214, 128
    %263 = vxpose.xlu0.b32.cont [2/16] %v215, 128
    %264 = vxpose.xlu0.b32.cont [3/16] %v216, 128
    %265 = vxpose.xlu0.b32.cont [4/16] %v217, 128
    %266 = vxpose.xlu0.b32.cont [5/16] %v218, 128
    %267 = vxpose.xlu0.b32.cont [6/16] %v219, 128
    %268 = vxpose.xlu0.b32.cont [7/16] %v220, 128
    %269 = vxpose.xlu0.b32.cont [8/16] %v221, 128
    %270 = vxpose.xlu0.b32.cont [9/16] %v222, 128
    %271 = vxpose.xlu0.b32.cont [10/16] %v223, 128
    %272 = vxpose.xlu0.b32.cont [11/16] %v224, 128
    %273 = vxpose.xlu0.b32.cont [12/16] %v225, 128
    %274 = vxpose.xlu0.b32.cont [13/16] %v226, 128
    %275 = vxpose.xlu0.b32.cont [14/16] %v227, 128
    %276 = vxpose.xlu0.b32.cont [15/16] %v228, 128
    %277 = vxpose.xlu0.b32.end [16/16] %v229, 128
    %v278 = vpop.trf.xlu0
    %v279 = vpop.trf.xlu0
    %v280 = vpop.trf.xlu0
    %v281 = vpop.trf.xlu0
    %v282 = vpop.trf.xlu0
    %v283 = vpop.trf.xlu0
    %v284 = vpop.trf.xlu0
    %v285 = vpop.trf.xlu0
    %v286 = vpop.trf.xlu0
    %v287 = vpop.trf.xlu0
    %v288 = vpop.trf.xlu0
    %v289 = vpop.trf.xlu0
    %v290 = vpop.trf.xlu0
    %v291 = vpop.trf.xlu0
    %v292 = vpop.trf.xlu0
    %v293 = vpop.trf.xlu0
    %v294 = vmul.f32 %v246, %v118
    %v295 = vmul.f32 %v278, %v118
    %v296 = vmul.f32 %v247, %v123
    %v297 = vmul.f32 %v279, %v123
    %v298 = vmul.f32 %v248, %v128
    %v299 = vmul.f32 %v280, %v128
    %v300 = vmul.f32 %v249, %v133
    %v301 = vmul.f32 %v281, %v133
    %v302 = vadd.f32 %v294, %v296
    %v303 = vadd.f32 %v302, %v298
    %v304 = vadd.f32 %v303, %v300
    %v305 = vrot.slane %v304, 4
    %v306 = vadd.f32 %v304, %v305
    %v307 = vrot.slane %v306, 2
    %v308 = vadd.f32 %v306, %v307
    %v309 = vrot.slane %v308, 1
    %v310 = vadd.f32 %v308, %v309
    %v311 = vadd.f32 %v295, %v297
    %v312 = vadd.f32 %v311, %v299
    %v313 = vadd.f32 %v312, %v301
    %v314 = vrot.slane %v313, 4
    %v315 = vadd.f32 %v313, %v314
    %v316 = vrot.slane %v315, 2
    %v317 = vadd.f32 %v315, %v316
    %v318 = vrot.slane %v317, 1
    %v319 = vadd.f32 %v317, %v318
    %v320 = vxor.u32 %v310, 2147483648
    %v321 = vxor.u32 %v319, 2147483648
    %v322 = vmul.f32 %v320, 1.442695
    %v323 = vpow.pop %v322
    %v324 = vmul.f32 %v321, 1.442695
    %v325 = vpow.pop %v324
    %v326 = vadd.f32 %v323, 1.0
    %v327 = vadd.f32 %v325, 1.0
    %v328 = vrcp.pop %v326
    %v329 = vmul.f32 1.0, %v328
    %v330 = vrcp.pop %v327
    %v331 = vmul.f32 1.0, %v330
    %s332 = scalar_lea.vmem %s0, 2
    %v333 = vld [vmem:[%s332] sm:$0x3]
    %v334 = vmul.f32 %v333, 2.0
    %v335 = vsub.f32 1.0, %v334
    %v338 = vcombine.low %v329, %v331
    %v340 = vunpack.c.l.s4 1966171168
    %v341 = vunpack.c.0.s8 %v340
    %v342 = vlaneseq
    %v343 = vshrl.u32 %v342, 7
    %v344 = vsub.s32 %v341, %v343
    %v345 = vrot.slane %v338, %v344
    %v347 = vunpack.c.l.s4 1966171168
    %v348 = vunpack.c.0.s8 %v347
    %v349 = vlaneseq
    %v350 = vshrl.u32 %v349, 7
    %v351 = vsub.s32 %v348, %v350
    %v352 = vrot.slane %v345, %v351
    %v354 = vmul.f32 %v335, %v352
    %v355 = vadd.f32 %v333, %v354
    %v356 = vadd.f32 %v196, %v355
    %s357 = scalar_lea.vmem %s1, 512
    %v358 = vld [vmem:[%s357] sm:$0xff]
    %v359 = vld [vmem:[%s357 + $0x8] sm:$0xff]
    %v360 = vld [vmem:[%s357 + $0x10] sm:$0xff]
    %v361 = vld [vmem:[%s357 + $0x18] sm:$0xff]
    %v362 = vld [vmem:[%s357 + $0x20] sm:$0xff]
    %v363 = vld [vmem:[%s357 + $0x28] sm:$0xff]
    %v364 = vld [vmem:[%s357 + $0x30] sm:$0xff]
    %v365 = vld [vmem:[%s357 + $0x38] sm:$0xff]
    %v366 = vld [vmem:[%s357 + $0x40] sm:$0xff]
    %v367 = vld [vmem:[%s357 + $0x48] sm:$0xff]
    %v368 = vld [vmem:[%s357 + $0x50] sm:$0xff]
    %v369 = vld [vmem:[%s357 + $0x58] sm:$0xff]
    %v370 = vld [vmem:[%s357 + $0x60] sm:$0xff]
    %v371 = vld [vmem:[%s357 + $0x68] sm:$0xff]
    %v372 = vld [vmem:[%s357 + $0x70] sm:$0xff]
    %v373 = vld [vmem:[%s357 + $0x78] sm:$0xff]
    %v374 = vld [vmem:[%s357 + $0x80] sm:$0xff]
    %v375 = vld [vmem:[%s357 + $0x88] sm:$0xff]
    %v376 = vld [vmem:[%s357 + $0x90] sm:$0xff]
    %v377 = vld [vmem:[%s357 + $0x98] sm:$0xff]
    %v378 = vld [vmem:[%s357 + $0xa0] sm:$0xff]
    %v379 = vld [vmem:[%s357 + $0xa8] sm:$0xff]
    %v380 = vld [vmem:[%s357 + $0xb0] sm:$0xff]
    %v381 = vld [vmem:[%s357 + $0xb8] sm:$0xff]
    %v382 = vld [vmem:[%s357 + $0xc0] sm:$0xff]
    %v383 = vld [vmem:[%s357 + $0xc8] sm:$0xff]
    %v384 = vld [vmem:[%s357 + $0xd0] sm:$0xff]
    %v385 = vld [vmem:[%s357 + $0xd8] sm:$0xff]
    %v386 = vld [vmem:[%s357 + $0xe0] sm:$0xff]
    %v387 = vld [vmem:[%s357 + $0xe8] sm:$0xff]
    %v388 = vld [vmem:[%s357 + $0xf0] sm:$0xff]
    %v389 = vld [vmem:[%s357 + $0xf8] sm:$0xff]
    %390 = vxpose.xlu0.b32.start [1/16] %v358, 128
    %391 = vxpose.xlu0.b32.cont [2/16] %v359, 128
    %392 = vxpose.xlu0.b32.cont [3/16] %v360, 128
    %393 = vxpose.xlu0.b32.cont [4/16] %v361, 128
    %394 = vxpose.xlu0.b32.cont [5/16] %v362, 128
    %395 = vxpose.xlu0.b32.cont [6/16] %v363, 128
    %396 = vxpose.xlu0.b32.cont [7/16] %v364, 128
    %397 = vxpose.xlu0.b32.cont [8/16] %v365, 128
    %398 = vxpose.xlu0.b32.cont [9/16] %v366, 128
    %399 = vxpose.xlu0.b32.cont [10/16] %v367, 128
    %400 = vxpose.xlu0.b32.cont [11/16] %v368, 128
    %401 = vxpose.xlu0.b32.cont [12/16] %v369, 128
    %402 = vxpose.xlu0.b32.cont [13/16] %v370, 128
    %403 = vxpose.xlu0.b32.cont [14/16] %v371, 128
    %404 = vxpose.xlu0.b32.cont [15/16] %v372, 128
    %405 = vxpose.xlu0.b32.end [16/16] %v373, 128
    %v406 = vpop.trf.xlu0
    %v407 = vpop.trf.xlu0
    %v408 = vpop.trf.xlu0
    %v409 = vpop.trf.xlu0
    %v410 = vpop.trf.xlu0
    %v411 = vpop.trf.xlu0
    %v412 = vpop.trf.xlu0
    %v413 = vpop.trf.xlu0
    %v414 = vpop.trf.xlu0
    %v415 = vpop.trf.xlu0
    %v416 = vpop.trf.xlu0
    %v417 = vpop.trf.xlu0
    %v418 = vpop.trf.xlu0
    %v419 = vpop.trf.xlu0
    %v420 = vpop.trf.xlu0
    %v421 = vpop.trf.xlu0
    %422 = vxpose.xlu0.b32.start [1/16] %v374, 128
    %423 = vxpose.xlu0.b32.cont [2/16] %v375, 128
    %424 = vxpose.xlu0.b32.cont [3/16] %v376, 128
    %425 = vxpose.xlu0.b32.cont [4/16] %v377, 128
    %426 = vxpose.xlu0.b32.cont [5/16] %v378, 128
    %427 = vxpose.xlu0.b32.cont [6/16] %v379, 128
    %428 = vxpose.xlu0.b32.cont [7/16] %v380, 128
    %429 = vxpose.xlu0.b32.cont [8/16] %v381, 128
    %430 = vxpose.xlu0.b32.cont [9/16] %v382, 128
    %431 = vxpose.xlu0.b32.cont [10/16] %v383, 128
    %432 = vxpose.xlu0.b32.cont [11/16] %v384, 128
    %433 = vxpose.xlu0.b32.cont [12/16] %v385, 128
    %434 = vxpose.xlu0.b32.cont [13/16] %v386, 128
    %435 = vxpose.xlu0.b32.cont [14/16] %v387, 128
    %436 = vxpose.xlu0.b32.cont [15/16] %v388, 128
    %437 = vxpose.xlu0.b32.end [16/16] %v389, 128
    %v438 = vpop.trf.xlu0
    %v439 = vpop.trf.xlu0
    %v440 = vpop.trf.xlu0
    %v441 = vpop.trf.xlu0
    %v442 = vpop.trf.xlu0
    %v443 = vpop.trf.xlu0
    %v444 = vpop.trf.xlu0
    %v445 = vpop.trf.xlu0
    %v446 = vpop.trf.xlu0
    %v447 = vpop.trf.xlu0
    %v448 = vpop.trf.xlu0
    %v449 = vpop.trf.xlu0
    %v450 = vpop.trf.xlu0
    %v451 = vpop.trf.xlu0
    %v452 = vpop.trf.xlu0
    %v453 = vpop.trf.xlu0
    %v454 = vmul.f32 %v406, %v118
    %v455 = vmul.f32 %v438, %v118
    %v456 = vmul.f32 %v407, %v123
    %v457 = vmul.f32 %v439, %v123
    %v458 = vmul.f32 %v408, %v128
    %v459 = vmul.f32 %v440, %v128
    %v460 = vmul.f32 %v409, %v133
    %v461 = vmul.f32 %v441, %v133
    %v462 = vadd.f32 %v454, %v456
    %v463 = vadd.f32 %v462, %v458
    %v464 = vadd.f32 %v463, %v460
    %v465 = vrot.slane %v464, 4
    %v466 = vadd.f32 %v464, %v465
    %v467 = vrot.slane %v466, 2
    %v468 = vadd.f32 %v466, %v467
    %v469 = vrot.slane %v468, 1
    %v470 = vadd.f32 %v468, %v469
    %v471 = vadd.f32 %v455, %v457
    %v472 = vadd.f32 %v471, %v459
    %v473 = vadd.f32 %v472, %v461
    %v474 = vrot.slane %v473, 4
    %v475 = vadd.f32 %v473, %v474
    %v476 = vrot.slane %v475, 2
    %v477 = vadd.f32 %v475, %v476
    %v478 = vrot.slane %v477, 1
    %v479 = vadd.f32 %v477, %v478
    %v480 = vxor.u32 %v470, 2147483648
    %v481 = vxor.u32 %v479, 2147483648
    %v482 = vmul.f32 %v480, 1.442695
    %v483 = vpow.pop %v482
    %v484 = vmul.f32 %v481, 1.442695
    %v485 = vpow.pop %v484
    %v486 = vadd.f32 %v483, 1.0
    %v487 = vadd.f32 %v485, 1.0
    %v488 = vrcp.pop %v486
    %v489 = vmul.f32 1.0, %v488
    %v490 = vrcp.pop %v487
    %v491 = vmul.f32 1.0, %v490
    %s492 = scalar_lea.vmem %s0, 4
    %v493 = vld [vmem:[%s492] sm:$0x3]
    %v494 = vmul.f32 %v493, 2.0
    %v495 = vsub.f32 1.0, %v494
    %v498 = vcombine.low %v489, %v491
    %v500 = vunpack.c.l.s4 1966171168
    %v501 = vunpack.c.0.s8 %v500
    %v502 = vlaneseq
    %v503 = vshrl.u32 %v502, 7
    %v504 = vsub.s32 %v501, %v503
    %v505 = vrot.slane %v498, %v504
    %v507 = vunpack.c.l.s4 1966171168
    %v508 = vunpack.c.0.s8 %v507
    %v509 = vlaneseq
    %v510 = vshrl.u32 %v509, 7
    %v511 = vsub.s32 %v508, %v510
    %v512 = vrot.slane %v505, %v511
    %v514 = vmul.f32 %v495, %v512
    %v515 = vadd.f32 %v493, %v514
    %v516 = vadd.f32 %v356, %v515
    %s517 = scalar_lea.vmem %s1, 768
    %v518 = vld [vmem:[%s517] sm:$0xff]
    %v519 = vld [vmem:[%s517 + $0x8] sm:$0xff]
    %v520 = vld [vmem:[%s517 + $0x10] sm:$0xff]
    %v521 = vld [vmem:[%s517 + $0x18] sm:$0xff]
    %v522 = vld [vmem:[%s517 + $0x20] sm:$0xff]
    %v523 = vld [vmem:[%s517 + $0x28] sm:$0xff]
    %v524 = vld [vmem:[%s517 + $0x30] sm:$0xff]
    %v525 = vld [vmem:[%s517 + $0x38] sm:$0xff]
    %v526 = vld [vmem:[%s517 + $0x40] sm:$0xff]
    %v527 = vld [vmem:[%s517 + $0x48] sm:$0xff]
    %v528 = vld [vmem:[%s517 + $0x50] sm:$0xff]
    %v529 = vld [vmem:[%s517 + $0x58] sm:$0xff]
    %v530 = vld [vmem:[%s517 + $0x60] sm:$0xff]
    %v531 = vld [vmem:[%s517 + $0x68] sm:$0xff]
    %v532 = vld [vmem:[%s517 + $0x70] sm:$0xff]
    %v533 = vld [vmem:[%s517 + $0x78] sm:$0xff]
    %v534 = vld [vmem:[%s517 + $0x80] sm:$0xff]
    %v535 = vld [vmem:[%s517 + $0x88] sm:$0xff]
    %v536 = vld [vmem:[%s517 + $0x90] sm:$0xff]
    %v537 = vld [vmem:[%s517 + $0x98] sm:$0xff]
    %v538 = vld [vmem:[%s517 + $0xa0] sm:$0xff]
    %v539 = vld [vmem:[%s517 + $0xa8] sm:$0xff]
    %v540 = vld [vmem:[%s517 + $0xb0] sm:$0xff]
    %v541 = vld [vmem:[%s517 + $0xb8] sm:$0xff]
    %v542 = vld [vmem:[%s517 + $0xc0] sm:$0xff]
    %v543 = vld [vmem:[%s517 + $0xc8] sm:$0xff]
    %v544 = vld [vmem:[%s517 + $0xd0] sm:$0xff]
    %v545 = vld [vmem:[%s517 + $0xd8] sm:$0xff]
    %v546 = vld [vmem:[%s517 + $0xe0] sm:$0xff]
    %v547 = vld [vmem:[%s517 + $0xe8] sm:$0xff]
    %v548 = vld [vmem:[%s517 + $0xf0] sm:$0xff]
    %v549 = vld [vmem:[%s517 + $0xf8] sm:$0xff]
    %550 = vxpose.xlu0.b32.start [1/16] %v518, 128
    %551 = vxpose.xlu0.b32.cont [2/16] %v519, 128
    %552 = vxpose.xlu0.b32.cont [3/16] %v520, 128
    %553 = vxpose.xlu0.b32.cont [4/16] %v521, 128
    %554 = vxpose.xlu0.b32.cont [5/16] %v522, 128
    %555 = vxpose.xlu0.b32.cont [6/16] %v523, 128
    %556 = vxpose.xlu0.b32.cont [7/16] %v524, 128
    %557 = vxpose.xlu0.b32.cont [8/16] %v525, 128
    %558 = vxpose.xlu0.b32.cont [9/16] %v526, 128
    %559 = vxpose.xlu0.b32.cont [10/16] %v527, 128
    %560 = vxpose.xlu0.b32.cont [11/16] %v528, 128
    %561 = vxpose.xlu0.b32.cont [12/16] %v529, 128
    %562 = vxpose.xlu0.b32.cont [13/16] %v530, 128
    %563 = vxpose.xlu0.b32.cont [14/16] %v531, 128
    %564 = vxpose.xlu0.b32.cont [15/16] %v532, 128
    %565 = vxpose.xlu0.b32.end [16/16] %v533, 128
    %v566 = vpop.trf.xlu0
    %v567 = vpop.trf.xlu0
    %v568 = vpop.trf.xlu0
    %v569 = vpop.trf.xlu0
    %v570 = vpop.trf.xlu0
    %v571 = vpop.trf.xlu0
    %v572 = vpop.trf.xlu0
    %v573 = vpop.trf.xlu0
    %v574 = vpop.trf.xlu0
    %v575 = vpop.trf.xlu0
    %v576 = vpop.trf.xlu0
    %v577 = vpop.trf.xlu0
    %v578 = vpop.trf.xlu0
    %v579 = vpop.trf.xlu0
    %v580 = vpop.trf.xlu0
    %v581 = vpop.trf.xlu0
    %582 = vxpose.xlu0.b32.start [1/16] %v534, 128
    %583 = vxpose.xlu0.b32.cont [2/16] %v535, 128
    %584 = vxpose.xlu0.b32.cont [3/16] %v536, 128
    %585 = vxpose.xlu0.b32.cont [4/16] %v537, 128
    %586 = vxpose.xlu0.b32.cont [5/16] %v538, 128
    %587 = vxpose.xlu0.b32.cont [6/16] %v539, 128
    %588 = vxpose.xlu0.b32.cont [7/16] %v540, 128
    %589 = vxpose.xlu0.b32.cont [8/16] %v541, 128
    %590 = vxpose.xlu0.b32.cont [9/16] %v542, 128
    %591 = vxpose.xlu0.b32.cont [10/16] %v543, 128
    %592 = vxpose.xlu0.b32.cont [11/16] %v544, 128
    %593 = vxpose.xlu0.b32.cont [12/16] %v545, 128
    %594 = vxpose.xlu0.b32.cont [13/16] %v546, 128
    %595 = vxpose.xlu0.b32.cont [14/16] %v547, 128
    %596 = vxpose.xlu0.b32.cont [15/16] %v548, 128
    %597 = vxpose.xlu0.b32.end [16/16] %v549, 128
    %v598 = vpop.trf.xlu0
    %v599 = vpop.trf.xlu0
    %v600 = vpop.trf.xlu0
    %v601 = vpop.trf.xlu0
    %v602 = vpop.trf.xlu0
    %v603 = vpop.trf.xlu0
    %v604 = vpop.trf.xlu0
    %v605 = vpop.trf.xlu0
    %v606 = vpop.trf.xlu0
    %v607 = vpop.trf.xlu0
    %v608 = vpop.trf.xlu0
    %v609 = vpop.trf.xlu0
    %v610 = vpop.trf.xlu0
    %v611 = vpop.trf.xlu0
    %v612 = vpop.trf.xlu0
    %v613 = vpop.trf.xlu0
    %v614 = vmul.f32 %v566, %v118
    %v615 = vmul.f32 %v598, %v118
    %v616 = vmul.f32 %v567, %v123
    %v617 = vmul.f32 %v599, %v123
    %v618 = vmul.f32 %v568, %v128
    %v619 = vmul.f32 %v600, %v128
    %v620 = vmul.f32 %v569, %v133
    %v621 = vmul.f32 %v601, %v133
    %v622 = vadd.f32 %v614, %v616
    %v623 = vadd.f32 %v622, %v618
    %v624 = vadd.f32 %v623, %v620
    %v625 = vrot.slane %v624, 4
    %v626 = vadd.f32 %v624, %v625
    %v627 = vrot.slane %v626, 2
    %v628 = vadd.f32 %v626, %v627
    %v629 = vrot.slane %v628, 1
    %v630 = vadd.f32 %v628, %v629
    %v631 = vadd.f32 %v615, %v617
    %v632 = vadd.f32 %v631, %v619
    %v633 = vadd.f32 %v632, %v621
    %v634 = vrot.slane %v633, 4
    %v635 = vadd.f32 %v633, %v634
    %v636 = vrot.slane %v635, 2
    %v637 = vadd.f32 %v635, %v636
    %v638 = vrot.slane %v637, 1
    %v639 = vadd.f32 %v637, %v638
    %v640 = vxor.u32 %v630, 2147483648
    %v641 = vxor.u32 %v639, 2147483648
    %v642 = vmul.f32 %v640, 1.442695
    %v643 = vpow.pop %v642
    %v644 = vmul.f32 %v641, 1.442695
    %v645 = vpow.pop %v644
    %v646 = vadd.f32 %v643, 1.0
    %v647 = vadd.f32 %v645, 1.0
    %v648 = vrcp.pop %v646
    %v649 = vmul.f32 1.0, %v648
    %v650 = vrcp.pop %v647
    %v651 = vmul.f32 1.0, %v650
    %s652 = scalar_lea.vmem %s0, 6
    %v653 = vld [vmem:[%s652] sm:$0x3]
    %v654 = vmul.f32 %v653, 2.0
    %v655 = vsub.f32 1.0, %v654
    %v658 = vcombine.low %v649, %v651
    %v660 = vunpack.c.l.s4 1966171168
    %v661 = vunpack.c.0.s8 %v660
    %v662 = vlaneseq
    %v663 = vshrl.u32 %v662, 7
    %v664 = vsub.s32 %v661, %v663
    %v665 = vrot.slane %v658, %v664
    %v667 = vunpack.c.l.s4 1966171168
    %v668 = vunpack.c.0.s8 %v667
    %v669 = vlaneseq
    %v670 = vshrl.u32 %v669, 7
    %v671 = vsub.s32 %v668, %v670
    %v672 = vrot.slane %v665, %v671
    %v674 = vmul.f32 %v655, %v672
    %v675 = vadd.f32 %v653, %v674
    %v676 = vadd.f32 %v516, %v675
    %v678 = vrot.slane %v676, 1
    %v680 = vadd.f32 %v676, %v678
    %v681 = vlaneseq
    %v682 = vshrl.u32 %v681, 7
    %vm683 = vcmp.eq.s32.totalorder %v682, 0
    %v685 = vlaneseq
    %v686 = vshrl.u32 %v685, 7
    %v687 = vsub.s32 0, %v686
    %v688 = vrot.slane %v680, %v687
    %v690 = vsel %vm683, %v688, 0.0
    %691 = vst [vmem:[#allocation2] sm:$0xff] %v690
    // Predicated region
    $region14: #{tpu_custom_call.1} parent=1 // pred_check
      _
    $region15: #{tpu_custom_call.1} parent=1 // pred_check_branch
      %693 = sbr.rel (0) target = $region17
    $region16: #{tpu_custom_call.1} parent=1 // pred_region
      %s695 = ssub.s32 128, 128
      %696 = vsyncadd [#allocation3], %s695
      %s698 = sshll.u32 [#allocation2], 4
      %s699 = int_to_ptr.vmem [resolvable:$true] %s698
      %701 = dma.vmem_to_hbm [thread:$0]  %s699, 128, %s3, [#allocation3]
    $region17: #{tpu_custom_call.1} parent=1 // pred_fallthru
      _
    // Predicated region
    $region18: #{tpu_custom_call.1} parent=1 // pred_check
      _
    $region19: #{tpu_custom_call.1} parent=1 // pred_check_branch
      %703 = sbr.rel (0) target = $region21
    $region20: #{tpu_custom_call.1} parent=1 // pred_region
      %704 = dma.done [#allocation3], 128
    $region21: #{tpu_custom_call.1} parent=1 // pred_fallthru
      _
    %705 = vsyncpa [#allocation3], 1

</llo_original>
